<compile_context>
chip_gen: v5e
topology: v5e:2x2
jax: 0.10.0
libtpu: 0.0.40
codegen_flags: <defaults>
</compile_context>

<pallas_src>
import functools

import jax
import jax.numpy as jnp
from jax.experimental import pallas as pl
from jax.experimental.pallas import tpu as pltpu

_LANE = 128      # last-dim (lane) granularity
_SUBLANE = 8     # second-to-last (sublane) granularity for f32
_MiB = 1024 * 1024


def _round_up(n, m):
    return ((n + m - 1) // m) * m


def _vmem_capacity_bytes():
    """Per-TensorCore VMEM capacity; conservative default if the query is unavailable."""
    try:
        info = pltpu.get_tpu_info()
        for name in ("vmem_capacity_bytes", "vmem_size_bytes", "vmem_bytes"):
            v = getattr(info, name, None)
            if v:
                return int(v)
    except Exception:
        pass
    return 64 * _MiB   # v7x per-TC VMEM (smallest of the three generations)


def _mlp_fused_kernel(*refs, n_layers):
    """refs = (x_ref, w0, b0, w1, b1, ..., w{L-1}, b{L-1}, o_ref).

    All refs are VMEM tiles.  The activation `h` stays on-chip between layers; ReLU is
    applied in-register.  Matmuls accumulate in f32 on the MXU (preferred_element_type).
    Note: when inputs are bf16, inter-layer activations are round-tripped through bf16
    (full MXU throughput); this deviates slightly from an f32 reference.
    """
    x_ref = refs[0]
    o_ref = refs[1 + 2 * n_layers]

    h = x_ref[...]
    for i in range(n_layers):
        w_ref = refs[1 + 2 * i]
        b_ref = refs[2 + 2 * i]
        acc = jnp.dot(h, w_ref[...], preferred_element_type=jnp.float32)
        acc = acc + b_ref[...].astype(jnp.float32)      # (1, out_p) broadcast over rows
        if i != n_layers - 1:
            acc = jnp.maximum(acc, 0.0)                 # ReLU in f32
            h = acc.astype(x_ref.dtype)                 # bf16 feed for next MXU pass
        else:
            h = acc
    o_ref[...] = h.astype(o_ref.dtype)


def init_feedforward_params(key, input_dim, hidden_dims, output_dim, dtype=jnp.float32):
    """Raw (unpadded) params mirroring nn.Linear default init (uniform +/- 1/sqrt(fan_in)).
    Weights are stored pre-transposed as (in_d, out_d)."""
    dims = [input_dim] + list(hidden_dims) + [output_dim]
    params = []
    for in_d, out_d in zip(dims[:-1], dims[1:]):
        key, kw, kb = jax.random.split(key, 3)
        bound = 1.0 / (in_d ** 0.5)
        w_t = jax.random.uniform(kw, (in_d, out_d), dtype, minval=-bound, maxval=bound)
        b = jax.random.uniform(kb, (out_d,), dtype, minval=-bound, maxval=bound)
        params.append((w_t, b))
    return params


def prepare_feedforward_params(params, dtype=jnp.bfloat16):
    """One-time pad (lane-dense) + cast of the weights/biases.

    Do this at init, not per forward call, so the hot path performs no weight copies.
    Zero padding is exact: padded input columns, padded weight rows/cols and padded
    bias lanes are zero, and ReLU(0)=0, so padded lanes stay zero through the net.
    """
    prepared = []
    for (w_t, b) in params:
        if dtype is not None:
            w_t = w_t.astype(dtype)
            b = b.astype(dtype)
        in_d, out_d = w_t.shape
        in_p = _round_up(in_d, _LANE)
        out_p = _round_up(out_d, _LANE)
        w_p = jnp.pad(w_t, ((0, in_p - in_d), (0, out_p - out_d)))
        b_p = jnp.pad(b.reshape(1, -1), ((0, 0), (0, out_p - out_d)))
        prepared.append((w_p, b_p))
    return prepared


def feedforward_pallas(padded_params, x, *, out_dim, single_buffer_weights=True):
    """Fused forward pass: Linear -> ReLU -> ... -> Linear (no ReLU on last).

    padded_params: list of (w_p, b_p) from prepare_feedforward_params
                   (w_p: (in_p, out_p) lane-padded, b_p: (1, out_p)).
    x:             (batch, in_d) with in_d <= padded_params[0][0].shape[0].
    out_dim:       logical (unpadded) output width, static.
    """
    n_layers = len(padded_params)
    batch, in_d = x.shape
    in_p = padded_params[0][0].shape[0]
    out_p = padded_params[-1][0].shape[1]
    dtype = x.dtype
    itemsize = jnp.dtype(dtype).itemsize

    # ---- resident-parameter footprint (Buffered(1) => one VMEM copy each) ----------
    param_bytes = sum(w.size * w.dtype.itemsize + b.size * b.dtype.itemsize
                      for (w, b) in padded_params)
    max_out_p = max(w.shape[1] for (w, _) in padded_params)

    # ---- generation-aware VMEM budget: ~100 MiB on v5e/v6e, ~48 MiB on v7x ---------
    cap = _vmem_capacity_bytes()
    vmem_limit = min(int(cap * 0.78125), cap - 16 * _MiB)

    # ---- batch tile: up to 256 rows fills the 256x256 MXU on v6e/v7x ---------------
    tm = min(_round_up(batch, _SUBLANE), 256)

    def _footprint(tm_):
        act = 2 * tm_ * in_p * itemsize              # double-buffered x tile
        act += 2 * tm_ * out_p * itemsize            # double-buffered out tile
        act += 3 * tm_ * max_out_p * 4               # f32 acc + casts (approx scratch)
        wb = param_bytes if single_buffer_weights else 2 * param_bytes
        return wb + act

    while tm > _SUBLANE and _footprint(tm) > vmem_limit:
        tm = max(_SUBLANE, _round_up(tm // 2, _SUBLANE))
    # TODO(synk): if _footprint(_SUBLANE) still exceeds vmem_limit, switch to in-kernel
    # N-tiled weight streaming (pltpu.emit_pipeline) instead of full-array weight blocks.

    b_pad = _round_up(batch, tm)
    grid = (b_pad // tm,)

    # ---- per-call padding of activations only (weights pre-padded at init) ---------
    x_p = jnp.pad(x, ((0, b_pad - batch), (0, in_p - in_d)))

    wb_kwargs = {}
    if single_buffer_weights:
        # Constant-index blocks never change across grid steps: one VMEM buffer suffices.
        wb_kwargs["pipeline_mode"] = pl.Buffered(1)

    inputs = [x_p]
    in_specs = [pl.BlockSpec((tm, in_p), lambda i: (i, 0))]
    flops = 0
    for (w_p, b_p) in padded_params:
        inputs.extend([w_p, b_p])
        in_specs.append(pl.BlockSpec(w_p.shape, lambda i: (0, 0), **wb_kwargs))
        in_specs.append(pl.BlockSpec(b_p.shape, lambda i: (0, 0), **wb_kwargs))
        flops += 2 * b_pad * w_p.shape[0] * w_p.shape[1]

    bytes_accessed = (x_p.size * x_p.dtype.itemsize
                      + param_bytes
                      + b_pad * out_p * itemsize)

    # Megacore: only shard the batch axis when per-core activation traffic outweighs
    # re-fetching the whole weight set into each TensorCore's VMEM (v7x: 2 TCs/chip).
    activation_bytes = b_pad * (in_p + out_p) * itemsize
    semantics = ("parallel",) if (grid[0] > 1 and activation_bytes >= param_bytes) \
        else ("arbitrary",)

    kernel = functools.partial(_mlp_fused_kernel, n_layers=n_layers)

    y_p = pl.pallas_call(
        kernel,
        out_shape=jax.ShapeDtypeStruct((b_pad, out_p), dtype),
        grid=grid,
        in_specs=in_specs,
        out_specs=pl.BlockSpec((tm, out_p), lambda i: (i, 0)),
        compiler_params=pltpu.CompilerParams(
            dimension_semantics=semantics,
            vmem_limit_bytes=vmem_limit,
        ),
        cost_estimate=pl.CostEstimate(
            flops=flops, transcendentals=0, bytes_accessed=bytes_accessed),
    )(*inputs)

    return y_p[:batch, :out_dim]


if __name__ == "__main__":
    # Small deterministic example consistent with the module:
    # FeedForward(input_dim=32, hidden_dims=[64, 48], output_dim=16), batch=8
    input_dim, hidden_dims, output_dim = 32, [64, 48], 16
    batch = 8

    key = jax.random.PRNGKey(0)
    key, kx = jax.random.split(key)
    x = jax.random.normal(kx, (batch, input_dim), jnp.float32)
    params = init_feedforward_params(key, input_dim, hidden_dims, output_dim, jnp.float32)

    # Reference: plain-JAX f32 version of the same math.
    ref = x
    for i, (w_t, b) in enumerate(params):
        ref = ref @ w_t + b
        if i != len(params) - 1:
            ref = jnp.maximum(ref, 0.0)

    def run(compute_dtype, single_buffer):
        prepared = prepare_feedforward_params(params, dtype=compute_dtype)
        fwd = jax.jit(functools.partial(
            feedforward_pallas, out_dim=output_dim,
            single_buffer_weights=single_buffer))
        y = fwd(prepared, x.astype(compute_dtype))
        jax.block_until_ready(y)
        return y

    def run_with_fallback(compute_dtype):
        try:
            return run(compute_dtype, True)
        except Exception:
            # Older jax without BlockSpec(pipeline_mode=...): default double buffering.
            return run(compute_dtype, False)

    # f32 path: exact against reference.
    y32 = run_with_fallback(jnp.float32)
    assert y32.shape == (batch, output_dim)
    assert jnp.allclose(y32, ref, atol=1e-5, rtol=1e-5)

    # bf16 path (default deployment dtype): looser tolerance due to bf16 inter-layer
    # activations (documented deviation from the f32 PyTorch reference).
    y16 = run_with_fallback(jnp.bfloat16)
    assert y16.shape == (batch, output_dim)
    assert jnp.allclose(y16.astype(jnp.float32), ref, atol=7e-2, rtol=7e-2)

    print("KERNEL_OK")
</pallas_src>

<mosaic_0001>
module attributes {stable_mosaic.version = 11 : i64} {
  func.func @_mlp_fused_kernel(%arg0: i32, %arg1: memref<8x128xf32, #tpu.memory_space<vmem>>, %arg2: memref<128x128xf32, #tpu.memory_space<vmem>>, %arg3: memref<1x128xf32, #tpu.memory_space<vmem>>, %arg4: memref<128x128xf32, #tpu.memory_space<vmem>>, %arg5: memref<1x128xf32, #tpu.memory_space<vmem>>, %arg6: memref<128x128xf32, #tpu.memory_space<vmem>>, %arg7: memref<1x128xf32, #tpu.memory_space<vmem>>, %arg8: memref<8x128xf32, #tpu.memory_space<vmem>>) attributes {dimension_semantics = [#tpu.dimension_semantics<arbitrary>], iteration_bounds = array<i64: 1>, scalar_prefetch = 0 : i64, scratch_operands = 0 : i64, tpu.core_type = #tpu.core_type<tc>, window_params = [{transform_indices = @transform_0, window_bounds = array<i64: 8, 128>}, {pipeline_mode = #tpu.pipeline_mode<synchronous>, transform_indices = @transform_1, window_bounds = array<i64: 128, 128>}, {pipeline_mode = #tpu.pipeline_mode<synchronous>, transform_indices = @transform_2, window_bounds = array<i64: 1, 128>}, {pipeline_mode = #tpu.pipeline_mode<synchronous>, transform_indices = @transform_3, window_bounds = array<i64: 128, 128>}, {pipeline_mode = #tpu.pipeline_mode<synchronous>, transform_indices = @transform_4, window_bounds = array<i64: 1, 128>}, {pipeline_mode = #tpu.pipeline_mode<synchronous>, transform_indices = @transform_5, window_bounds = array<i64: 128, 128>}, {pipeline_mode = #tpu.pipeline_mode<synchronous>, transform_indices = @transform_6, window_bounds = array<i64: 1, 128>}, {transform_indices = @transform_7, window_bounds = array<i64: 8, 128>}]} {
    %c0 = arith.constant 0 : index
    %c0_0 = arith.constant 0 : index
    %0 = vector.load %arg1[%c0, %c0_0] : memref<8x128xf32, #tpu.memory_space<vmem>>, vector<8x128xf32>
    %c0_1 = arith.constant 0 : index
    %c0_2 = arith.constant 0 : index
    %1 = vector.load %arg2[%c0_1, %c0_2] : memref<128x128xf32, #tpu.memory_space<vmem>>, vector<128x128xf32>
    %cst = arith.constant dense<0.000000e+00> : vector<8x128xf32>
    %2 = tpu.matmul %0, %1, %cst {dimension_numbers = #tpu.dot_dimension_numbers<[1], [0], [0], [1], [0, 0, 1, 1], [], []>} : vector<8x128xf32>, vector<128x128xf32>, vector<8x128xf32> -> vector<8x128xf32>
    %c0_3 = arith.constant 0 : index
    %c0_4 = arith.constant 0 : index
    %3 = vector.load %arg3[%c0_3, %c0_4] : memref<1x128xf32, #tpu.memory_space<vmem>>, vector<1x128xf32>
    %4 = vector.broadcast %3 : vector<1x128xf32> to vector<8x128xf32>
    %5 = arith.addf %2, %4 : vector<8x128xf32>
    %cst_5 = arith.constant 0.000000e+00 : f32
    %6 = vector.broadcast %cst_5 : f32 to vector<8x128xf32>
    %7 = arith.maximumf %5, %6 : vector<8x128xf32>
    %c0_6 = arith.constant 0 : index
    %c0_7 = arith.constant 0 : index
    %8 = vector.load %arg4[%c0_6, %c0_7] : memref<128x128xf32, #tpu.memory_space<vmem>>, vector<128x128xf32>
    %cst_8 = arith.constant dense<0.000000e+00> : vector<8x128xf32>
    %9 = tpu.matmul %7, %8, %cst_8 {dimension_numbers = #tpu.dot_dimension_numbers<[1], [0], [0], [1], [0, 0, 1, 1], [], []>} : vector<8x128xf32>, vector<128x128xf32>, vector<8x128xf32> -> vector<8x128xf32>
    %c0_9 = arith.constant 0 : index
    %c0_10 = arith.constant 0 : index
    %10 = vector.load %arg5[%c0_9, %c0_10] : memref<1x128xf32, #tpu.memory_space<vmem>>, vector<1x128xf32>
    %11 = vector.broadcast %10 : vector<1x128xf32> to vector<8x128xf32>
    %12 = arith.addf %9, %11 : vector<8x128xf32>
    %cst_11 = arith.constant 0.000000e+00 : f32
    %13 = vector.broadcast %cst_11 : f32 to vector<8x128xf32>
    %14 = arith.maximumf %12, %13 : vector<8x128xf32>
    %c0_12 = arith.constant 0 : index
    %c0_13 = arith.constant 0 : index
    %15 = vector.load %arg6[%c0_12, %c0_13] : memref<128x128xf32, #tpu.memory_space<vmem>>, vector<128x128xf32>
    %cst_14 = arith.constant dense<0.000000e+00> : vector<8x128xf32>
    %16 = tpu.matmul %14, %15, %cst_14 {dimension_numbers = #tpu.dot_dimension_numbers<[1], [0], [0], [1], [0, 0, 1, 1], [], []>} : vector<8x128xf32>, vector<128x128xf32>, vector<8x128xf32> -> vector<8x128xf32>
    %c0_15 = arith.constant 0 : index
    %c0_16 = arith.constant 0 : index
    %17 = vector.load %arg7[%c0_15, %c0_16] : memref<1x128xf32, #tpu.memory_space<vmem>>, vector<1x128xf32>
    %18 = vector.broadcast %17 : vector<1x128xf32> to vector<8x128xf32>
    %19 = arith.addf %16, %18 : vector<8x128xf32>
    %c0_17 = arith.constant 0 : index
    %c0_18 = arith.constant 0 : index
    %20 = vector.load %arg8[%c0_17, %c0_18] : memref<8x128xf32, #tpu.memory_space<vmem>>, vector<8x128xf32>
    tpu.vector_store %arg8[%c0_17, %c0_18], %19 {strides = array<i32>} : memref<8x128xf32, #tpu.memory_space<vmem>>, vector<8x128xf32>,
    return
  }
  func.func @transform_0(%arg0: i32) -> (i32, i32) {
    %c0_i32 = arith.constant 0 : i32
    %c0_i32_0 = arith.constant 0 : i32
    return %arg0, %c0_i32 : i32, i32
  }
  func.func @transform_1(%arg0: i32) -> (i32, i32) {
    %c0_i32 = arith.constant 0 : i32
    %c0_i32_0 = arith.constant 0 : i32
    %c0_i32_1 = arith.constant 0 : i32
    return %c0_i32, %c0_i32_0 : i32, i32
  }
  func.func @transform_2(%arg0: i32) -> (i32, i32) {
    %c0_i32 = arith.constant 0 : i32
    %c0_i32_0 = arith.constant 0 : i32
    %c0_i32_1 = arith.constant 0 : i32
    return %c0_i32, %c0_i32_0 : i32, i32
  }
  func.func @transform_3(%arg0: i32) -> (i32, i32) {
    %c0_i32 = arith.constant 0 : i32
    %c0_i32_0 = arith.constant 0 : i32
    %c0_i32_1 = arith.constant 0 : i32
    return %c0_i32, %c0_i32_0 : i32, i32
  }
  func.func @transform_4(%arg0: i32) -> (i32, i32) {
    %c0_i32 = arith.constant 0 : i32
    %c0_i32_0 = arith.constant 0 : i32
    %c0_i32_1 = arith.constant 0 : i32
    return %c0_i32, %c0_i32_0 : i32, i32
  }
  func.func @transform_5(%arg0: i32) -> (i32, i32) {
    %c0_i32 = arith.constant 0 : i32
    %c0_i32_0 = arith.constant 0 : i32
    %c0_i32_1 = arith.constant 0 : i32
    return %c0_i32, %c0_i32_0 : i32, i32
  }
  func.func @transform_6(%arg0: i32) -> (i32, i32) {
    %c0_i32 = arith.constant 0 : i32
    %c0_i32_0 = arith.constant 0 : i32
    %c0_i32_1 = arith.constant 0 : i32
    return %c0_i32, %c0_i32_0 : i32, i32
  }
  func.func @transform_7(%arg0: i32) -> (i32, i32) {
    %c0_i32 = arith.constant 0 : i32
    %c0_i32_0 = arith.constant 0 : i32
    return %arg0, %c0_i32 : i32, i32
  }
}

module attributes {stable_mosaic.version = 11 : i64} {
  func.func @_mlp_fused_kernel(%arg0: i32, %arg1: memref<8x128xf32, #tpu.memory_space<vmem>>, %arg2: memref<128x128xf32, #tpu.memory_space<vmem>>, %arg3: memref<1x128xf32, #tpu.memory_space<vmem>>, %arg4: memref<128x128xf32, #tpu.memory_space<vmem>>, %arg5: memref<1x128xf32, #tpu.memory_space<vmem>>, %arg6: memref<128x128xf32, #tpu.memory_space<vmem>>, %arg7: memref<1x128xf32, #tpu.memory_space<vmem>>, %arg8: memref<8x128xf32, #tpu.memory_space<vmem>>) attributes {dimension_semantics = [#tpu.dimension_semantics<arbitrary>], iteration_bounds = array<i64: 1>, scalar_prefetch = 0 : i64, scratch_operands = 0 : i64, tpu.core_type = #tpu.core_type<tc>, window_params = [{transform_indices = @transform_0, window_bounds = array<i64: 8, 128>}, {pipeline_mode = #tpu.pipeline_mode<synchronous>, transform_indices = @transform_1, window_bounds = array<i64: 128, 128>}, {pipeline_mode = #tpu.pipeline_mode<synchronous>, transform_indices = @transform_2, window_bounds = array<i64: 1, 128>}, {pipeline_mode = #tpu.pipeline_mode<synchronous>, transform_indices = @transform_3, window_bounds = array<i64: 128, 128>}, {pipeline_mode = #tpu.pipeline_mode<synchronous>, transform_indices = @transform_4, window_bounds = array<i64: 1, 128>}, {pipeline_mode = #tpu.pipeline_mode<synchronous>, transform_indices = @transform_5, window_bounds = array<i64: 128, 128>}, {pipeline_mode = #tpu.pipeline_mode<synchronous>, transform_indices = @transform_6, window_bounds = array<i64: 1, 128>}, {transform_indices = @transform_7, window_bounds = array<i64: 8, 128>}]} {
    %c0 = arith.constant 0 : index
    %c0_0 = arith.constant 0 : index
    %0 = vector.load %arg1[%c0, %c0_0] : memref<8x128xf32, #tpu.memory_space<vmem>>, vector<8x128xf32>
    %c0_1 = arith.constant 0 : index
    %c0_2 = arith.constant 0 : index
    %1 = vector.load %arg2[%c0_1, %c0_2] : memref<128x128xf32, #tpu.memory_space<vmem>>, vector<128x128xf32>
    %cst = arith.constant dense<0.000000e+00> : vector<8x128xf32>
    %2 = tpu.matmul %0, %1, %cst {dimension_numbers = #tpu.dot_dimension_numbers<[1], [0], [0], [1], [0, 0, 1, 1], [], []>} : vector<8x128xf32>, vector<128x128xf32>, vector<8x128xf32> -> vector<8x128xf32>
    %c0_3 = arith.constant 0 : index
    %c0_4 = arith.constant 0 : index
    %3 = vector.load %arg3[%c0_3, %c0_4] : memref<1x128xf32, #tpu.memory_space<vmem>>, vector<1x128xf32>
    %4 = vector.broadcast %3 : vector<1x128xf32> to vector<8x128xf32>
    %5 = arith.addf %2, %4 : vector<8x128xf32>
    %cst_5 = arith.constant 0.000000e+00 : f32
    %6 = vector.broadcast %cst_5 : f32 to vector<8x128xf32>
    %7 = arith.maximumf %5, %6 : vector<8x128xf32>
    %c0_6 = arith.constant 0 : index
    %c0_7 = arith.constant 0 : index
    %8 = vector.load %arg4[%c0_6, %c0_7] : memref<128x128xf32, #tpu.memory_space<vmem>>, vector<128x128xf32>
    %cst_8 = arith.constant dense<0.000000e+00> : vector<8x128xf32>
    %9 = tpu.matmul %7, %8, %cst_8 {dimension_numbers = #tpu.dot_dimension_numbers<[1], [0], [0], [1], [0, 0, 1, 1], [], []>} : vector<8x128xf32>, vector<128x128xf32>, vector<8x128xf32> -> vector<8x128xf32>
    %c0_9 = arith.constant 0 : index
    %c0_10 = arith.constant 0 : index
    %10 = vector.load %arg5[%c0_9, %c0_10] : memref<1x128xf32, #tpu.memory_space<vmem>>, vector<1x128xf32>
    %11 = vector.broadcast %10 : vector<1x128xf32> to vector<8x128xf32>
    %12 = arith.addf %9, %11 : vector<8x128xf32>
    %cst_11 = arith.constant 0.000000e+00 : f32
    %13 = vector.broadcast %cst_11 : f32 to vector<8x128xf32>
    %14 = arith.maximumf %12, %13 : vector<8x128xf32>
    %c0_12 = arith.constant 0 : index
    %c0_13 = arith.constant 0 : index
    %15 = vector.load %arg6[%c0_12, %c0_13] : memref<128x128xf32, #tpu.memory_space<vmem>>, vector<128x128xf32>
    %cst_14 = arith.constant dense<0.000000e+00> : vector<8x128xf32>
    %16 = tpu.matmul %14, %15, %cst_14 {dimension_numbers = #tpu.dot_dimension_numbers<[1], [0], [0], [1], [0, 0, 1, 1], [], []>} : vector<8x128xf32>, vector<128x128xf32>, vector<8x128xf32> -> vector<8x128xf32>
    %c0_15 = arith.constant 0 : index
    %c0_16 = arith.constant 0 : index
    %17 = vector.load %arg7[%c0_15, %c0_16] : memref<1x128xf32, #tpu.memory_space<vmem>>, vector<1x128xf32>
    %18 = vector.broadcast %17 : vector<1x128xf32> to vector<8x128xf32>
    %19 = arith.addf %16, %18 : vector<8x128xf32>
    %c0_17 = arith.constant 0 : index
    %c0_18 = arith.constant 0 : index
    %20 = vector.load %arg8[%c0_17, %c0_18] : memref<8x128xf32, #tpu.memory_space<vmem>>, vector<8x128xf32>
    tpu.vector_store %arg8[%c0_17, %c0_18], %19 {strides = array<i32>} : memref<8x128xf32, #tpu.memory_space<vmem>>, vector<8x128xf32>,
    return
  }
  func.func @transform_0(%arg0: i32) -> (i32, i32) {
    %c0_i32 = arith.constant 0 : i32
    %c0_i32_0 = arith.constant 0 : i32
    return %arg0, %c0_i32 : i32, i32
  }
  func.func @transform_1(%arg0: i32) -> (i32, i32) {
    %c0_i32 = arith.constant 0 : i32
    %c0_i32_0 = arith.constant 0 : i32
    %c0_i32_1 = arith.constant 0 : i32
    return %c0_i32, %c0_i32_0 : i32, i32
  }
  func.func @transform_2(%arg0: i32) -> (i32, i32) {
    %c0_i32 = arith.constant 0 : i32
    %c0_i32_0 = arith.constant 0 : i32
    %c0_i32_1 = arith.constant 0 : i32
    return %c0_i32, %c0_i32_0 : i32, i32
  }
  func.func @transform_3(%arg0: i32) -> (i32, i32) {
    %c0_i32 = arith.constant 0 : i32
    %c0_i32_0 = arith.constant 0 : i32
    %c0_i32_1 = arith.constant 0 : i32
    return %c0_i32, %c0_i32_0 : i32, i32
  }
  func.func @transform_4(%arg0: i32) -> (i32, i32) {
    %c0_i32 = arith.constant 0 : i32
    %c0_i32_0 = arith.constant 0 : i32
    %c0_i32_1 = arith.constant 0 : i32
    return %c0_i32, %c0_i32_0 : i32, i32
  }
  func.func @transform_5(%arg0: i32) -> (i32, i32) {
    %c0_i32 = arith.constant 0 : i32
    %c0_i32_0 = arith.constant 0 : i32
    %c0_i32_1 = arith.constant 0 : i32
    return %c0_i32, %c0_i32_0 : i32, i32
  }
  func.func @transform_6(%arg0: i32) -> (i32, i32) {
    %c0_i32 = arith.constant 0 : i32
    %c0_i32_0 = arith.constant 0 : i32
    %c0_i32_1 = arith.constant 0 : i32
    return %c0_i32, %c0_i32_0 : i32, i32
  }
  func.func @transform_7(%arg0: i32) -> (i32, i32) {
    %c0_i32 = arith.constant 0 : i32
    %c0_i32_0 = arith.constant 0 : i32
    return %arg0, %c0_i32 : i32, i32
  }
}

</mosaic_0001>

<llo_original>
// kernel: feedforward_pallas.1
$region0: #{feedforward_pallas.1}
  #allocation0 [shape = 'u32[]', space=smem, size = 0x4, offset = 0x4, fixed_abs, tag = 'smem constant byte address 0x4 - core index']
  #allocation1 [shape = 'u32[72,128]{1,0:T(1,128)}', space=vmem, size = 0x9000, scoped, tag = 'internal scratch']
  %s0 = inlined_call_operand.vmem [shape: f32[8,128], index: 0, kind: input, shape index: {}]
  %s1 = inlined_call_operand.hbm [shape: f32[128,128], index: 1, kind: input, shape index: {}]
  %s2 = inlined_call_operand.vmem [shape: f32[1,128], index: 2, kind: input, shape index: {}]
  %s3 = inlined_call_operand.hbm [shape: f32[128,128], index: 3, kind: input, shape index: {}]
  %s4 = inlined_call_operand.vmem [shape: f32[1,128], index: 4, kind: input, shape index: {}]
  %s5 = inlined_call_operand.hbm [shape: f32[128,128], index: 5, kind: input, shape index: {}]
  %s6 = inlined_call_operand.vmem [shape: f32[1,128], index: 6, kind: input, shape index: {}]
  %s7 = inlined_call_operand.hbm [shape: f32[8,128], index: 7, kind: output, shape index: {}]
  %s8 = sld [smem:[#allocation0]]
  $region50: #{feedforward_pallas.1} parent=0
    _
  %s10 = ssub.s32 1, %s8
  %s11 = scalar_select 0, %s10, %s8
  $region1: #{feedforward_pallas.1} parent=0
    #allocation2 [shape = 'u8[65536]{0}', space=vmem, size = 0x10000, scoped, tag = 'input window, operand 1, single buffered']
    #allocation3 [shape = 's32[1]{0}', space=sflag, size = 0x4, scoped, tag = 'scoped memory for feedforward_pallas.1']
    #allocation4 [shape = 's32[1]{0}', space=sflag, size = 0x4, scoped, tag = 'scoped memory for feedforward_pallas.1']
    #allocation5 [shape = 'u8[65536]{0}', space=vmem, size = 0x10000, scoped, tag = 'input window, operand 3, single buffered']
    #allocation6 [shape = 's32[1]{0}', space=sflag, size = 0x4, scoped, tag = 'scoped memory for feedforward_pallas.1']
    #allocation7 [shape = 'u8[65536]{0}', space=vmem, size = 0x10000, scoped, tag = 'input window, operand 5, single buffered']
    #allocation8 [shape = 'u8[4096]{0}', space=vmem, size = 0x1000, scoped, tag = 'output window, operand 0, single buffered']
    %12 = vsyncpa [#allocation3], 0
    %13 = vsyncpa [#allocation6], 0
    %14 = vsyncpa [#allocation4], 0
    // Predicated region
    $region2: #{feedforward_pallas.1} parent=1 // pred_check
      _
    $region3: #{feedforward_pallas.1} parent=1 // pred_check_branch
      %16 = sbr.rel (0) target = $region5
    $region4: #{feedforward_pallas.1} parent=1 // pred_region
      _
    $region5: #{feedforward_pallas.1} parent=1 // pred_fallthru
      _
    // Predicated region
    $region6: #{feedforward_pallas.1} parent=1 // pred_check
      _
    $region7: #{feedforward_pallas.1} parent=1 // pred_check_branch
      %18 = sbr.rel (0) target = $region9
    $region8: #{feedforward_pallas.1} parent=1 // pred_region
      %20 = vsyncadd [#allocation3], 0
      %s21 = sshll.u32 %s1, 4
      %s22 = int_to_ptr.hbm [resolvable:$true] %s21
      %s23 = sshll.u32 [#allocation2], 4
      %s24 = int_to_ptr.vmem [resolvable:$true] %s23
      %29 = dma.hbm_to_vmem [thread:$0]  %s22, 2048, %s24, [#allocation3], 128, 128, 8
    $region9: #{feedforward_pallas.1} parent=1 // pred_fallthru
      _
    // Predicated region
    $region10: #{feedforward_pallas.1} parent=1 // pred_check
      _
    $region11: #{feedforward_pallas.1} parent=1 // pred_check_branch
      %31 = sbr.rel (0) target = $region13
    $region12: #{feedforward_pallas.1} parent=1 // pred_region
      _
    $region13: #{feedforward_pallas.1} parent=1 // pred_fallthru
      _
    // Predicated region
    $region14: #{feedforward_pallas.1} parent=1 // pred_check
      _
    $region15: #{feedforward_pallas.1} parent=1 // pred_check_branch
      %33 = sbr.rel (0) target = $region17
    $region16: #{feedforward_pallas.1} parent=1 // pred_region
      %35 = vsyncadd [#allocation6], 0
      %s36 = sshll.u32 %s3, 4
      %s37 = int_to_ptr.hbm [resolvable:$true] %s36
      %s38 = sshll.u32 [#allocation5], 4
      %s39 = int_to_ptr.vmem [resolvable:$true] %s38
      %44 = dma.hbm_to_vmem [thread:$0]  %s37, 2048, %s39, [#allocation6], 128, 128, 8
    $region17: #{feedforward_pallas.1} parent=1 // pred_fallthru
      _
    // Predicated region
    $region18: #{feedforward_pallas.1} parent=1 // pred_check
      _
    $region19: #{feedforward_pallas.1} parent=1 // pred_check_branch
      %46 = sbr.rel (0) target = $region21
    $region20: #{feedforward_pallas.1} parent=1 // pred_region
      _
    $region21: #{feedforward_pallas.1} parent=1 // pred_fallthru
      _
    // Predicated region
    $region22: #{feedforward_pallas.1} parent=1 // pred_check
      _
    $region23: #{feedforward_pallas.1} parent=1 // pred_check_branch
      %48 = sbr.rel (0) target = $region25
    $region24: #{feedforward_pallas.1} parent=1 // pred_region
      %50 = vsyncadd [#allocation6], 0
      %s51 = sshll.u32 %s5, 4
      %s52 = int_to_ptr.hbm [resolvable:$true] %s51
      %s53 = sshll.u32 [#allocation7], 4
      %s54 = int_to_ptr.vmem [resolvable:$true] %s53
      %59 = dma.hbm_to_vmem [thread:$0]  %s52, 2048, %s54, [#allocation6], 128, 128, 8
    $region25: #{feedforward_pallas.1} parent=1 // pred_fallthru
      _
    // Predicated region
    $region26: #{feedforward_pallas.1} parent=1 // pred_check
      _
    $region27: #{feedforward_pallas.1} parent=1 // pred_check_branch
      %61 = sbr.rel (0) target = $region29
    $region28: #{feedforward_pallas.1} parent=1 // pred_region
      _
    $region29: #{feedforward_pallas.1} parent=1 // pred_fallthru
      _
    // Predicated region
    $region30: #{feedforward_pallas.1} parent=1 // pred_check
      _
    $region31: #{feedforward_pallas.1} parent=1 // pred_check_branch
      %63 = sbr.rel (0) target = $region33
    $region32: #{feedforward_pallas.1} parent=1 // pred_region
      %65 = dma.done [#allocation3], 2048
    $region33: #{feedforward_pallas.1} parent=1 // pred_fallthru
      _
    // Predicated region
    $region34: #{feedforward_pallas.1} parent=1 // pred_check
      _
    $region35: #{feedforward_pallas.1} parent=1 // pred_check_branch
      %67 = sbr.rel (0) target = $region37
    $region36: #{feedforward_pallas.1} parent=1 // pred_region
      %69 = dma.done [#allocation6], 2048
    $region37: #{feedforward_pallas.1} parent=1 // pred_fallthru
      _
    // Predicated region
    $region38: #{feedforward_pallas.1} parent=1 // pred_check
      _
    $region39: #{feedforward_pallas.1} parent=1 // pred_check_branch
      %71 = sbr.rel (0) target = $region41
    $region40: #{feedforward_pallas.1} parent=1 // pred_region
      %73 = dma.done [#allocation6], 2048
    $region41: #{feedforward_pallas.1} parent=1 // pred_fallthru
      _
    %v74 = vld [vmem:[%s0] sm:$0xff]
    %v75 = vld [vmem:[#allocation2] sm:$0xff]
    %v76 = vld [vmem:[#allocation2 + $0x8] sm:$0xff]
    %v77 = vld [vmem:[#allocation2 + $0x10] sm:$0xff]
    %v78 = vld [vmem:[#allocation2 + $0x18] sm:$0xff]
    %v79 = vld [vmem:[#allocation2 + $0x20] sm:$0xff]
    %v80 = vld [vmem:[#allocation2 + $0x28] sm:$0xff]
    %v81 = vld [vmem:[#allocation2 + $0x30] sm:$0xff]
    %v82 = vld [vmem:[#allocation2 + $0x38] sm:$0xff]
    %v83 = vld [vmem:[#allocation2 + $0x40] sm:$0xff]
    %v84 = vld [vmem:[#allocation2 + $0x48] sm:$0xff]
    %v85 = vld [vmem:[#allocation2 + $0x50] sm:$0xff]
    %v86 = vld [vmem:[#allocation2 + $0x58] sm:$0xff]
    %v87 = vld [vmem:[#allocation2 + $0x60] sm:$0xff]
    %v88 = vld [vmem:[#allocation2 + $0x68] sm:$0xff]
    %v89 = vld [vmem:[#allocation2 + $0x70] sm:$0xff]
    %v90 = vld [vmem:[#allocation2 + $0x78] sm:$0xff]
    %v91 = vld [vmem:[%s2] sm:$0x1]
    %v93 = vperm.slane %v91, 0
    %95 = vmatpush.msra.mxu0 %v90
    %96 = vmatpush.msra.mxu0 %v89
    %97 = vmatpush.msra.mxu0 %v88
    %98 = vmatpush.msra.mxu0 %v87
    %99 = vmatpush.msra.mxu0 %v86
    %100 = vmatpush.msra.mxu0 %v85
    %101 = vmatpush.msra.mxu0 %v84
    %102 = vmatpush.msra.mxu0 %v83
    %103 = vmatpush.msra.mxu0 %v82
    %104 = vmatpush.msra.mxu0 %v81
    %105 = vmatpush.msra.mxu0 %v80
    %106 = vmatpush.msra.mxu0 %v79
    %107 = vmatpush.msra.mxu0 %v78
    %108 = vmatpush.msra.mxu0 %v77
    %109 = vmatpush.msra.mxu0 %v76
    %110 = vmatpush.msra.mxu0 %v75
    %111 = vmatmul.f32.gmra.mxu0 %v74
    %v112 = vpop.f32.mrf.mxu0
    %v113 = vadd.f32 %v93, %v112
    %114 = vdwg.mxu0
    %v115 = vmax.f32 %v113, 0.0
    %v116 = vld [vmem:[#allocation5] sm:$0xff]
    %v117 = vld [vmem:[#allocation5 + $0x8] sm:$0xff]
    %v118 = vld [vmem:[#allocation5 + $0x10] sm:$0xff]
    %v119 = vld [vmem:[#allocation5 + $0x18] sm:$0xff]
    %v120 = vld [vmem:[#allocation5 + $0x20] sm:$0xff]
    %v121 = vld [vmem:[#allocation5 + $0x28] sm:$0xff]
    %v122 = vld [vmem:[#allocation5 + $0x30] sm:$0xff]
    %v123 = vld [vmem:[#allocation5 + $0x38] sm:$0xff]
    %v124 = vld [vmem:[#allocation5 + $0x40] sm:$0xff]
    %v125 = vld [vmem:[#allocation5 + $0x48] sm:$0xff]
    %v126 = vld [vmem:[#allocation5 + $0x50] sm:$0xff]
    %v127 = vld [vmem:[#allocation5 + $0x58] sm:$0xff]
    %v128 = vld [vmem:[#allocation5 + $0x60] sm:$0xff]
    %v129 = vld [vmem:[#allocation5 + $0x68] sm:$0xff]
    %v130 = vld [vmem:[#allocation5 + $0x70] sm:$0xff]
    %v131 = vld [vmem:[#allocation5 + $0x78] sm:$0xff]
    %v132 = vld [vmem:[%s4] sm:$0x1]
    %v134 = vperm.slane %v132, 0
    %136 = vmatpush.msra.mxu0 %v131
    %137 = vmatpush.msra.mxu0 %v130
    %138 = vmatpush.msra.mxu0 %v129
    %139 = vmatpush.msra.mxu0 %v128
    %140 = vmatpush.msra.mxu0 %v127
    %141 = vmatpush.msra.mxu0 %v126
    %142 = vmatpush.msra.mxu0 %v125
    %143 = vmatpush.msra.mxu0 %v124
    %144 = vmatpush.msra.mxu0 %v123
    %145 = vmatpush.msra.mxu0 %v122
    %146 = vmatpush.msra.mxu0 %v121
    %147 = vmatpush.msra.mxu0 %v120
    %148 = vmatpush.msra.mxu0 %v119
    %149 = vmatpush.msra.mxu0 %v118
    %150 = vmatpush.msra.mxu0 %v117
    %151 = vmatpush.msra.mxu0 %v116
    %152 = vmatmul.f32.gmra.mxu0 %v115
    %v153 = vpop.f32.mrf.mxu0
    %v154 = vadd.f32 %v134, %v153
    %155 = vdwg.mxu0
    %v156 = vmax.f32 %v154, 0.0
    %v157 = vld [vmem:[#allocation7] sm:$0xff]
    %v158 = vld [vmem:[#allocation7 + $0x8] sm:$0xff]
    %v159 = vld [vmem:[#allocation7 + $0x10] sm:$0xff]
    %v160 = vld [vmem:[#allocation7 + $0x18] sm:$0xff]
    %v161 = vld [vmem:[#allocation7 + $0x20] sm:$0xff]
    %v162 = vld [vmem:[#allocation7 + $0x28] sm:$0xff]
    %v163 = vld [vmem:[#allocation7 + $0x30] sm:$0xff]
    %v164 = vld [vmem:[#allocation7 + $0x38] sm:$0xff]
    %v165 = vld [vmem:[#allocation7 + $0x40] sm:$0xff]
    %v166 = vld [vmem:[#allocation7 + $0x48] sm:$0xff]
    %v167 = vld [vmem:[#allocation7 + $0x50] sm:$0xff]
    %v168 = vld [vmem:[#allocation7 + $0x58] sm:$0xff]
    %v169 = vld [vmem:[#allocation7 + $0x60] sm:$0xff]
    %v170 = vld [vmem:[#allocation7 + $0x68] sm:$0xff]
    %v171 = vld [vmem:[#allocation7 + $0x70] sm:$0xff]
    %v172 = vld [vmem:[#allocation7 + $0x78] sm:$0xff]
    %v173 = vld [vmem:[%s6] sm:$0x1]
    %v175 = vperm.slane %v173, 0
    %177 = vmatpush.msra.mxu0 %v172
    %178 = vmatpush.msra.mxu0 %v171
    %179 = vmatpush.msra.mxu0 %v170
    %180 = vmatpush.msra.mxu0 %v169
    %181 = vmatpush.msra.mxu0 %v168
    %182 = vmatpush.msra.mxu0 %v167
    %183 = vmatpush.msra.mxu0 %v166
    %184 = vmatpush.msra.mxu0 %v165
    %185 = vmatpush.msra.mxu0 %v164
    %186 = vmatpush.msra.mxu0 %v163
    %187 = vmatpush.msra.mxu0 %v162
    %188 = vmatpush.msra.mxu0 %v161
    %189 = vmatpush.msra.mxu0 %v160
    %190 = vmatpush.msra.mxu0 %v159
    %191 = vmatpush.msra.mxu0 %v158
    %192 = vmatpush.msra.mxu0 %v157
    %193 = vmatmul.f32.gmra.mxu0 %v156
    %v194 = vpop.f32.mrf.mxu0
    %v195 = vadd.f32 %v175, %v194
    %196 = vdwg.mxu0
    %197 = vst [vmem:[#allocation8] sm:$0xff] %v195
    // Predicated region
    $region42: #{feedforward_pallas.1} parent=1 // pred_check
      _
    $region43: #{feedforward_pallas.1} parent=1 // pred_check_branch
      %199 = sbr.rel (0) target = $region45
    $region44: #{feedforward_pallas.1} parent=1 // pred_region
      %201 = vsyncadd [#allocation4], 0
      %s203 = sshll.u32 [#allocation8], 4
      %s204 = int_to_ptr.vmem [resolvable:$true] %s203
      %s205 = sshll.u32 %s7, 4
      %s206 = int_to_ptr.hbm [resolvable:$true] %s205
      %208 = dma.vmem_to_hbm [thread:$0]  %s204, 128, %s206, [#allocation4]
    $region45: #{feedforward_pallas.1} parent=1 // pred_fallthru
      _
    // Predicated region
    $region46: #{feedforward_pallas.1} parent=1 // pred_check
      _
    $region47: #{feedforward_pallas.1} parent=1 // pred_check_branch
      %210 = sbr.rel (0) target = $region49
    $region48: #{feedforward_pallas.1} parent=1 // pred_region
      %212 = dma.done [#allocation4], 128
    $region49: #{feedforward_pallas.1} parent=1 // pred_fallthru
      _
    %213 = vsyncpa [#allocation3], 1
    %214 = vsyncpa [#allocation6], 1
    %215 = vsyncpa [#allocation4], 1

// kernel: feedforward_pallas.1
$region0: #{feedforward_pallas.1}
  #allocation0 [shape = 'u32[]', space=smem, size = 0x4, offset = 0x4, fixed_abs, tag = 'smem constant byte address 0x4 - core index']
  #allocation1 [shape = 'u32[72,128]{1,0:T(1,128)}', space=vmem, size = 0x9000, scoped, tag = 'internal scratch']
  %s0 = inlined_call_operand.vmem [shape: f32[8,128], index: 0, kind: input, shape index: {}]
  %s1 = inlined_call_operand.hbm [shape: f32[128,128], index: 1, kind: input, shape index: {}]
  %s2 = inlined_call_operand.vmem [shape: f32[1,128], index: 2, kind: input, shape index: {}]
  %s3 = inlined_call_operand.hbm [shape: f32[128,128], index: 3, kind: input, shape index: {}]
  %s4 = inlined_call_operand.vmem [shape: f32[1,128], index: 4, kind: input, shape index: {}]
  %s5 = inlined_call_operand.hbm [shape: f32[128,128], index: 5, kind: input, shape index: {}]
  %s6 = inlined_call_operand.vmem [shape: f32[1,128], index: 6, kind: input, shape index: {}]
  %s7 = inlined_call_operand.hbm [shape: f32[8,128], index: 7, kind: output, shape index: {}]
  %s8 = sld [smem:[#allocation0]]
  $region50: #{feedforward_pallas.1} parent=0
    _
  %s10 = ssub.s32 1, %s8
  %s11 = scalar_select 0, %s10, %s8
  $region1: #{feedforward_pallas.1} parent=0
    #allocation2 [shape = 'u8[65536]{0}', space=vmem, size = 0x10000, scoped, tag = 'input window, operand 1, single buffered']
    #allocation3 [shape = 's32[1]{0}', space=sflag, size = 0x4, scoped, tag = 'scoped memory for feedforward_pallas.1']
    #allocation4 [shape = 's32[1]{0}', space=sflag, size = 0x4, scoped, tag = 'scoped memory for feedforward_pallas.1']
    #allocation5 [shape = 'u8[65536]{0}', space=vmem, size = 0x10000, scoped, tag = 'input window, operand 3, single buffered']
    #allocation6 [shape = 's32[1]{0}', space=sflag, size = 0x4, scoped, tag = 'scoped memory for feedforward_pallas.1']
    #allocation7 [shape = 'u8[65536]{0}', space=vmem, size = 0x10000, scoped, tag = 'input window, operand 5, single buffered']
    #allocation8 [shape = 'u8[4096]{0}', space=vmem, size = 0x1000, scoped, tag = 'output window, operand 0, single buffered']
    %12 = vsyncpa [#allocation3], 0
    %13 = vsyncpa [#allocation6], 0
    %14 = vsyncpa [#allocation4], 0
    // Predicated region
    $region2: #{feedforward_pallas.1} parent=1 // pred_check
      _
    $region3: #{feedforward_pallas.1} parent=1 // pred_check_branch
      %16 = sbr.rel (0) target = $region5
    $region4: #{feedforward_pallas.1} parent=1 // pred_region
      _
    $region5: #{feedforward_pallas.1} parent=1 // pred_fallthru
      _
    // Predicated region
    $region6: #{feedforward_pallas.1} parent=1 // pred_check
      _
    $region7: #{feedforward_pallas.1} parent=1 // pred_check_branch
      %18 = sbr.rel (0) target = $region9
    $region8: #{feedforward_pallas.1} parent=1 // pred_region
      %20 = vsyncadd [#allocation3], 0
      %s21 = sshll.u32 %s1, 4
      %s22 = int_to_ptr.hbm [resolvable:$true] %s21
      %s23 = sshll.u32 [#allocation2], 4
      %s24 = int_to_ptr.vmem [resolvable:$true] %s23
      %29 = dma.hbm_to_vmem [thread:$0]  %s22, 2048, %s24, [#allocation3], 128, 128, 8
    $region9: #{feedforward_pallas.1} parent=1 // pred_fallthru
      _
    // Predicated region
    $region10: #{feedforward_pallas.1} parent=1 // pred_check
      _
    $region11: #{feedforward_pallas.1} parent=1 // pred_check_branch
      %31 = sbr.rel (0) target = $region13
    $region12: #{feedforward_pallas.1} parent=1 // pred_region
      _
    $region13: #{feedforward_pallas.1} parent=1 // pred_fallthru
      _
    // Predicated region
    $region14: #{feedforward_pallas.1} parent=1 // pred_check
      _
    $region15: #{feedforward_pallas.1} parent=1 // pred_check_branch
      %33 = sbr.rel (0) target = $region17
    $region16: #{feedforward_pallas.1} parent=1 // pred_region
      %35 = vsyncadd [#allocation6], 0
      %s36 = sshll.u32 %s3, 4
      %s37 = int_to_ptr.hbm [resolvable:$true] %s36
      %s38 = sshll.u32 [#allocation5], 4
      %s39 = int_to_ptr.vmem [resolvable:$true] %s38
      %44 = dma.hbm_to_vmem [thread:$0]  %s37, 2048, %s39, [#allocation6], 128, 128, 8
    $region17: #{feedforward_pallas.1} parent=1 // pred_fallthru
      _
    // Predicated region
    $region18: #{feedforward_pallas.1} parent=1 // pred_check
      _
    $region19: #{feedforward_pallas.1} parent=1 // pred_check_branch
      %46 = sbr.rel (0) target = $region21
    $region20: #{feedforward_pallas.1} parent=1 // pred_region
      _
    $region21: #{feedforward_pallas.1} parent=1 // pred_fallthru
      _
    // Predicated region
    $region22: #{feedforward_pallas.1} parent=1 // pred_check
      _
    $region23: #{feedforward_pallas.1} parent=1 // pred_check_branch
      %48 = sbr.rel (0) target = $region25
    $region24: #{feedforward_pallas.1} parent=1 // pred_region
      %50 = vsyncadd [#allocation6], 0
      %s51 = sshll.u32 %s5, 4
      %s52 = int_to_ptr.hbm [resolvable:$true] %s51
      %s53 = sshll.u32 [#allocation7], 4
      %s54 = int_to_ptr.vmem [resolvable:$true] %s53
      %59 = dma.hbm_to_vmem [thread:$0]  %s52, 2048, %s54, [#allocation6], 128, 128, 8
    $region25: #{feedforward_pallas.1} parent=1 // pred_fallthru
      _
    // Predicated region
    $region26: #{feedforward_pallas.1} parent=1 // pred_check
      _
    $region27: #{feedforward_pallas.1} parent=1 // pred_check_branch
      %61 = sbr.rel (0) target = $region29
    $region28: #{feedforward_pallas.1} parent=1 // pred_region
      _
    $region29: #{feedforward_pallas.1} parent=1 // pred_fallthru
      _
    // Predicated region
    $region30: #{feedforward_pallas.1} parent=1 // pred_check
      _
    $region31: #{feedforward_pallas.1} parent=1 // pred_check_branch
      %63 = sbr.rel (0) target = $region33
    $region32: #{feedforward_pallas.1} parent=1 // pred_region
      %65 = dma.done [#allocation3], 2048
    $region33: #{feedforward_pallas.1} parent=1 // pred_fallthru
      _
    // Predicated region
    $region34: #{feedforward_pallas.1} parent=1 // pred_check
      _
    $region35: #{feedforward_pallas.1} parent=1 // pred_check_branch
      %67 = sbr.rel (0) target = $region37
    $region36: #{feedforward_pallas.1} parent=1 // pred_region
      %69 = dma.done [#allocation6], 2048
    $region37: #{feedforward_pallas.1} parent=1 // pred_fallthru
      _
    // Predicated region
    $region38: #{feedforward_pallas.1} parent=1 // pred_check
      _
    $region39: #{feedforward_pallas.1} parent=1 // pred_check_branch
      %71 = sbr.rel (0) target = $region41
    $region40: #{feedforward_pallas.1} parent=1 // pred_region
      %73 = dma.done [#allocation6], 2048
    $region41: #{feedforward_pallas.1} parent=1 // pred_fallthru
      _
    %v74 = vld [vmem:[%s0] sm:$0xff]
    %v75 = vld [vmem:[#allocation2] sm:$0xff]
    %v76 = vld [vmem:[#allocation2 + $0x8] sm:$0xff]
    %v77 = vld [vmem:[#allocation2 + $0x10] sm:$0xff]
    %v78 = vld [vmem:[#allocation2 + $0x18] sm:$0xff]
    %v79 = vld [vmem:[#allocation2 + $0x20] sm:$0xff]
    %v80 = vld [vmem:[#allocation2 + $0x28] sm:$0xff]
    %v81 = vld [vmem:[#allocation2 + $0x30] sm:$0xff]
    %v82 = vld [vmem:[#allocation2 + $0x38] sm:$0xff]
    %v83 = vld [vmem:[#allocation2 + $0x40] sm:$0xff]
    %v84 = vld [vmem:[#allocation2 + $0x48] sm:$0xff]
    %v85 = vld [vmem:[#allocation2 + $0x50] sm:$0xff]
    %v86 = vld [vmem:[#allocation2 + $0x58] sm:$0xff]
    %v87 = vld [vmem:[#allocation2 + $0x60] sm:$0xff]
    %v88 = vld [vmem:[#allocation2 + $0x68] sm:$0xff]
    %v89 = vld [vmem:[#allocation2 + $0x70] sm:$0xff]
    %v90 = vld [vmem:[#allocation2 + $0x78] sm:$0xff]
    %v91 = vld [vmem:[%s2] sm:$0x1]
    %v93 = vperm.slane %v91, 0
    %95 = vmatpush.msra.mxu0 %v90
    %96 = vmatpush.msra.mxu0 %v89
    %97 = vmatpush.msra.mxu0 %v88
    %98 = vmatpush.msra.mxu0 %v87
    %99 = vmatpush.msra.mxu0 %v86
    %100 = vmatpush.msra.mxu0 %v85
    %101 = vmatpush.msra.mxu0 %v84
    %102 = vmatpush.msra.mxu0 %v83
    %103 = vmatpush.msra.mxu0 %v82
    %104 = vmatpush.msra.mxu0 %v81
    %105 = vmatpush.msra.mxu0 %v80
    %106 = vmatpush.msra.mxu0 %v79
    %107 = vmatpush.msra.mxu0 %v78
    %108 = vmatpush.msra.mxu0 %v77
    %109 = vmatpush.msra.mxu0 %v76
    %110 = vmatpush.msra.mxu0 %v75
    %111 = vmatmul.f32.gmra.mxu0 %v74
    %v112 = vpop.f32.mrf.mxu0
    %v113 = vadd.f32 %v93, %v112
    %114 = vdwg.mxu0
    %v115 = vmax.f32 %v113, 0.0
    %v116 = vld [vmem:[#allocation5] sm:$0xff]
    %v117 = vld [vmem:[#allocation5 + $0x8] sm:$0xff]
    %v118 = vld [vmem:[#allocation5 + $0x10] sm:$0xff]
    %v119 = vld [vmem:[#allocation5 + $0x18] sm:$0xff]
    %v120 = vld [vmem:[#allocation5 + $0x20] sm:$0xff]
    %v121 = vld [vmem:[#allocation5 + $0x28] sm:$0xff]
    %v122 = vld [vmem:[#allocation5 + $0x30] sm:$0xff]
    %v123 = vld [vmem:[#allocation5 + $0x38] sm:$0xff]
    %v124 = vld [vmem:[#allocation5 + $0x40] sm:$0xff]
    %v125 = vld [vmem:[#allocation5 + $0x48] sm:$0xff]
    %v126 = vld [vmem:[#allocation5 + $0x50] sm:$0xff]
    %v127 = vld [vmem:[#allocation5 + $0x58] sm:$0xff]
    %v128 = vld [vmem:[#allocation5 + $0x60] sm:$0xff]
    %v129 = vld [vmem:[#allocation5 + $0x68] sm:$0xff]
    %v130 = vld [vmem:[#allocation5 + $0x70] sm:$0xff]
    %v131 = vld [vmem:[#allocation5 + $0x78] sm:$0xff]
    %v132 = vld [vmem:[%s4] sm:$0x1]
    %v134 = vperm.slane %v132, 0
    %136 = vmatpush.msra.mxu0 %v131
    %137 = vmatpush.msra.mxu0 %v130
    %138 = vmatpush.msra.mxu0 %v129
    %139 = vmatpush.msra.mxu0 %v128
    %140 = vmatpush.msra.mxu0 %v127
    %141 = vmatpush.msra.mxu0 %v126
    %142 = vmatpush.msra.mxu0 %v125
    %143 = vmatpush.msra.mxu0 %v124
    %144 = vmatpush.msra.mxu0 %v123
    %145 = vmatpush.msra.mxu0 %v122
    %146 = vmatpush.msra.mxu0 %v121
    %147 = vmatpush.msra.mxu0 %v120
    %148 = vmatpush.msra.mxu0 %v119
    %149 = vmatpush.msra.mxu0 %v118
    %150 = vmatpush.msra.mxu0 %v117
    %151 = vmatpush.msra.mxu0 %v116
    %152 = vmatmul.f32.gmra.mxu0 %v115
    %v153 = vpop.f32.mrf.mxu0
    %v154 = vadd.f32 %v134, %v153
    %155 = vdwg.mxu0
    %v156 = vmax.f32 %v154, 0.0
    %v157 = vld [vmem:[#allocation7] sm:$0xff]
    %v158 = vld [vmem:[#allocation7 + $0x8] sm:$0xff]
    %v159 = vld [vmem:[#allocation7 + $0x10] sm:$0xff]
    %v160 = vld [vmem:[#allocation7 + $0x18] sm:$0xff]
    %v161 = vld [vmem:[#allocation7 + $0x20] sm:$0xff]
    %v162 = vld [vmem:[#allocation7 + $0x28] sm:$0xff]
    %v163 = vld [vmem:[#allocation7 + $0x30] sm:$0xff]
    %v164 = vld [vmem:[#allocation7 + $0x38] sm:$0xff]
    %v165 = vld [vmem:[#allocation7 + $0x40] sm:$0xff]
    %v166 = vld [vmem:[#allocation7 + $0x48] sm:$0xff]
    %v167 = vld [vmem:[#allocation7 + $0x50] sm:$0xff]
    %v168 = vld [vmem:[#allocation7 + $0x58] sm:$0xff]
    %v169 = vld [vmem:[#allocation7 + $0x60] sm:$0xff]
    %v170 = vld [vmem:[#allocation7 + $0x68] sm:$0xff]
    %v171 = vld [vmem:[#allocation7 + $0x70] sm:$0xff]
    %v172 = vld [vmem:[#allocation7 + $0x78] sm:$0xff]
    %v173 = vld [vmem:[%s6] sm:$0x1]
    %v175 = vperm.slane %v173, 0
    %177 = vmatpush.msra.mxu0 %v172
    %178 = vmatpush.msra.mxu0 %v171
    %179 = vmatpush.msra.mxu0 %v170
    %180 = vmatpush.msra.mxu0 %v169
    %181 = vmatpush.msra.mxu0 %v168
    %182 = vmatpush.msra.mxu0 %v167
    %183 = vmatpush.msra.mxu0 %v166
    %184 = vmatpush.msra.mxu0 %v165
    %185 = vmatpush.msra.mxu0 %v164
    %186 = vmatpush.msra.mxu0 %v163
    %187 = vmatpush.msra.mxu0 %v162
    %188 = vmatpush.msra.mxu0 %v161
    %189 = vmatpush.msra.mxu0 %v160
    %190 = vmatpush.msra.mxu0 %v159
    %191 = vmatpush.msra.mxu0 %v158
    %192 = vmatpush.msra.mxu0 %v157
    %193 = vmatmul.f32.gmra.mxu0 %v156
    %v194 = vpop.f32.mrf.mxu0
    %v195 = vadd.f32 %v175, %v194
    %196 = vdwg.mxu0
    %197 = vst [vmem:[#allocation8] sm:$0xff] %v195
    // Predicated region
    $region42: #{feedforward_pallas.1} parent=1 // pred_check
      _
    $region43: #{feedforward_pallas.1} parent=1 // pred_check_branch
      %199 = sbr.rel (0) target = $region45
    $region44: #{feedforward_pallas.1} parent=1 // pred_region
      %201 = vsyncadd [#allocation4], 0
      %s203 = sshll.u32 [#allocation8], 4
      %s204 = int_to_ptr.vmem [resolvable:$true] %s203
      %s205 = sshll.u32 %s7, 4
      %s206 = int_to_ptr.hbm [resolvable:$true] %s205
      %208 = dma.vmem_to_hbm [thread:$0]  %s204, 128, %s206, [#allocation4]
    $region45: #{feedforward_pallas.1} parent=1 // pred_fallthru
      _
    // Predicated region
    $region46: #{feedforward_pallas.1} parent=1 // pred_check
      _
    $region47: #{feedforward_pallas.1} parent=1 // pred_check_branch
      %210 = sbr.rel (0) target = $region49
    $region48: #{feedforward_pallas.1} parent=1 // pred_region
      %212 = dma.done [#allocation4], 128
    $region49: #{feedforward_pallas.1} parent=1 // pred_fallthru
      _
    %213 = vsyncpa [#allocation3], 1
    %214 = vsyncpa [#allocation6], 1
    %215 = vsyncpa [#allocation4], 1

</llo_original>
